<compile_context>
chip_gen: v7x
topology: tpu7x:2x2x1
jax: 0.10.0
libtpu: 0.0.40
codegen_flags: <defaults>
</compile_context>

<pallas_src>
import jax
import jax.numpy as jnp
from jax.experimental import pallas as pl
from jax.experimental.pallas import tpu as pltpu


def _round_up(n: int, m: int) -> int:
    return ((n + m - 1) // m) * m


def mlp_kernel(x_ref, w1_ref, b1_ref, w2_ref, b2_ref, o_ref):
    """Fused MLP tile: (x @ w1 + b1) -> ReLU -> (@ w2 + b2)."""
    # Hidden layer: MXU matmul, f32 accumulation; bias + ReLU on the VPU in f32.
    h = jnp.dot(x_ref[...], w1_ref[...], preferred_element_type=jnp.float32)
    h = jnp.maximum(h + b1_ref[...], 0.0)

    # Output layer: cast activations to the weight dtype (no-op for f32 weights,
    # bf16 for the low-precision path), accumulate in f32.
    y = jnp.dot(h.astype(w2_ref.dtype), w2_ref[...],
                preferred_element_type=jnp.float32)
    o_ref[...] = (y + b2_ref[...]).astype(o_ref.dtype)


def mlp_forward(x, w1, b1, w2, b2, *, block_batch=512, out_dtype=jnp.float32):
    """x: [B, in]; w1: [in, hid]; b1: [1, hid]; w2: [hid, out]; b2: [1, out]."""
    B, in_units = x.shape
    hid_units = w1.shape[1]
    out_units = w2.shape[1]

    # Batch tile: as large as requested (big tiles -> high HBM roofline
    # fraction), rounded to the 8-row sublane granule, shrunk for tiny batches.
    tb = min(block_batch, _round_up(B, 8))
    b_pad = _round_up(B, tb)
    if b_pad != B:
        x = jnp.pad(x, ((0, b_pad - B), (0, 0)))
    grid = (b_pad // tb,)

    vmem = pltpu.MemorySpace.VMEM

    # x / out: tiled over batch. Weights/biases: full-extent blocks with a
    # constant index_map -> loaded into VMEM once, resident for every step.
    in_specs = [
        pl.BlockSpec((tb, in_units), lambda i: (i, 0), memory_space=vmem),
        pl.BlockSpec((in_units, hid_units), lambda i: (0, 0), memory_space=vmem),
        pl.BlockSpec((1, hid_units), lambda i: (0, 0), memory_space=vmem),
        pl.BlockSpec((hid_units, out_units), lambda i: (0, 0), memory_space=vmem),
        pl.BlockSpec((1, out_units), lambda i: (0, 0), memory_space=vmem),
    ]
    # NOTE: out_units=2 < 128 means the HBM-facing stores are lane-masked; the
    # writeback bytes are ~10x smaller than the x reads, so reads stay dominant.
    out_specs = pl.BlockSpec((tb, out_units), lambda i: (i, 0), memory_space=vmem)

    out = pl.pallas_call(
        mlp_kernel,
        out_shape=jax.ShapeDtypeStruct((b_pad, out_units), out_dtype),
        grid=grid,
        in_specs=in_specs,
        out_specs=out_specs,
        compiler_params=pltpu.CompilerParams(
            # Batch axis is embarrassingly parallel -> shard across v7x's 2 TCs.
            dimension_semantics=("parallel",),
        ),
    )(x, w1, b1, w2, b2)

    return out[:B] if b_pad != B else out


def init_params(key, input_units=20, hidden_units=10, output_units=2):
    """Deterministic init mimicking nn.Linear's uniform(-1/sqrt(fan_in), ...)."""
    k1, k2, k3, k4 = jax.random.split(key, 4)
    lim1 = 1.0 / jnp.sqrt(jnp.float32(input_units))
    lim2 = 1.0 / jnp.sqrt(jnp.float32(hidden_units))
    # Stored as [in, out] (transpose of PyTorch's [out, in]).
    w1 = jax.random.uniform(k1, (input_units, hidden_units), jnp.float32, -lim1, lim1)
    b1 = jax.random.uniform(k2, (1, hidden_units), jnp.float32, -lim1, lim1)
    w2 = jax.random.uniform(k3, (hidden_units, output_units), jnp.float32, -lim2, lim2)
    b2 = jax.random.uniform(k4, (1, output_units), jnp.float32, -lim2, lim2)
    return w1, b1, w2, b2


def reference_forward(x, w1, b1, w2, b2):
    """Pure-JAX reference for correctness checks."""
    h = jnp.maximum(x.astype(jnp.float32) @ w1.astype(jnp.float32) + b1, 0.0)
    return h @ w2.astype(jnp.float32) + b2


if __name__ == "__main__":
    key = jax.random.PRNGKey(0)
    kx, kp, kl = jax.random.split(key, 3)

    batch = 8
    input_units, hidden_units, output_units = 20, 10, 2

    x = jax.random.normal(kx, (batch, input_units), jnp.float32)
    w1, b1, w2, b2 = init_params(kp, input_units, hidden_units, output_units)

    # 1) f32 path at the module's default small shapes (matches PyTorch numerics).
    out = jax.block_until_ready(mlp_forward(x, w1, b1, w2, b2))
    ref = reference_forward(x, w1, b1, w2, b2)
    assert out.shape == (batch, output_units), out.shape
    assert jnp.allclose(out, ref, atol=1e-5, rtol=1e-5), "f32 mismatch vs reference"

    # 2) bf16-input perf path (halves HBM read traffic on v6e/v7x; f32 accumulate).
    xb = x.astype(jnp.bfloat16)
    w1b, w2b = w1.astype(jnp.bfloat16), w2.astype(jnp.bfloat16)
    out_bf16 = jax.block_until_ready(mlp_forward(xb, w1b, b1, w2b, b2))
    assert jnp.allclose(out_bf16, ref, atol=1e-1, rtol=1e-1), "bf16 path mismatch"

    # 3) Larger, non-tile-multiple batch to exercise the grid + padding path.
    big_batch = 1000
    xl = jax.random.normal(kl, (big_batch, input_units), jnp.float32)
    out_l = jax.block_until_ready(mlp_forward(xl, w1, b1, w2, b2, block_batch=512))
    ref_l = reference_forward(xl, w1, b1, w2, b2)
    assert out_l.shape == (big_batch, output_units)
    assert jnp.allclose(out_l, ref_l, atol=1e-5, rtol=1e-5), "tiled path mismatch"

    print("KERNEL_OK")
</pallas_src>

<mosaic_0001>
module attributes {stable_mosaic.version = 11 : i64} {
  func.func @mlp_kernel(%arg0: i32, %arg1: memref<8x20xf32, #tpu.memory_space<vmem>>, %arg2: memref<20x10xf32, #tpu.memory_space<vmem>>, %arg3: memref<1x10xf32, #tpu.memory_space<vmem>>, %arg4: memref<10x2xf32, #tpu.memory_space<vmem>>, %arg5: memref<1x2xf32, #tpu.memory_space<vmem>>, %arg6: memref<8x2xf32, #tpu.memory_space<vmem>>) attributes {dimension_semantics = [#tpu.dimension_semantics<parallel>], iteration_bounds = array<i64: 1>, scalar_prefetch = 0 : i64, scratch_operands = 0 : i64, tpu.core_type = #tpu.core_type<tc>, window_params = [{transform_indices = @transform_0, window_bounds = array<i64: 8, 20>}, {pipeline_mode = #tpu.pipeline_mode<synchronous>, transform_indices = @transform_1, window_bounds = array<i64: 20, 10>}, {pipeline_mode = #tpu.pipeline_mode<synchronous>, transform_indices = @transform_2, window_bounds = array<i64: 1, 10>}, {pipeline_mode = #tpu.pipeline_mode<synchronous>, transform_indices = @transform_3, window_bounds = array<i64: 10, 2>}, {pipeline_mode = #tpu.pipeline_mode<synchronous>, transform_indices = @transform_4, window_bounds = array<i64: 1, 2>}, {transform_indices = @transform_5, window_bounds = array<i64: 8, 2>}]} {
    %c0 = arith.constant 0 : index
    %c0_0 = arith.constant 0 : index
    %0 = vector.load %arg1[%c0, %c0_0] : memref<8x20xf32, #tpu.memory_space<vmem>>, vector<8x20xf32>
    %c0_1 = arith.constant 0 : index
    %c0_2 = arith.constant 0 : index
    %1 = vector.load %arg2[%c0_1, %c0_2] : memref<20x10xf32, #tpu.memory_space<vmem>>, vector<20x10xf32>
    %cst = arith.constant dense<0.000000e+00> : vector<8x10xf32>
    %2 = tpu.matmul %0, %1, %cst {dimension_numbers = #tpu.dot_dimension_numbers<[1], [0], [0], [1], [0, 0, 1, 1], [], []>} : vector<8x20xf32>, vector<20x10xf32>, vector<8x10xf32> -> vector<8x10xf32>
    %c0_3 = arith.constant 0 : index
    %c0_4 = arith.constant 0 : index
    %3 = vector.load %arg3[%c0_3, %c0_4] : memref<1x10xf32, #tpu.memory_space<vmem>>, vector<1x10xf32>
    %4 = vector.broadcast %3 : vector<1x10xf32> to vector<8x10xf32>
    %5 = arith.addf %2, %4 : vector<8x10xf32>
    %cst_5 = arith.constant 0.000000e+00 : f32
    %6 = vector.broadcast %cst_5 : f32 to vector<8x10xf32>
    %7 = arith.maximumf %5, %6 : vector<8x10xf32>
    %c0_6 = arith.constant 0 : index
    %c0_7 = arith.constant 0 : index
    %8 = vector.load %arg4[%c0_6, %c0_7] : memref<10x2xf32, #tpu.memory_space<vmem>>, vector<10x2xf32>
    %cst_8 = arith.constant dense<0.000000e+00> : vector<8x2xf32>
    %9 = tpu.matmul %7, %8, %cst_8 {dimension_numbers = #tpu.dot_dimension_numbers<[1], [0], [0], [1], [0, 0, 1, 1], [], []>} : vector<8x10xf32>, vector<10x2xf32>, vector<8x2xf32> -> vector<8x2xf32>
    %c0_9 = arith.constant 0 : index
    %c0_10 = arith.constant 0 : index
    %10 = vector.load %arg5[%c0_9, %c0_10] : memref<1x2xf32, #tpu.memory_space<vmem>>, vector<1x2xf32>
    %11 = vector.broadcast %10 : vector<1x2xf32> to vector<8x2xf32>
    %12 = arith.addf %9, %11 : vector<8x2xf32>
    %c0_11 = arith.constant 0 : index
    %c0_12 = arith.constant 0 : index
    %13 = vector.load %arg6[%c0_11, %c0_12] : memref<8x2xf32, #tpu.memory_space<vmem>>, vector<8x2xf32>
    tpu.vector_store %arg6[%c0_11, %c0_12], %12 {strides = array<i32>} : memref<8x2xf32, #tpu.memory_space<vmem>>, vector<8x2xf32>,
    return
  }
  func.func @transform_0(%arg0: i32) -> (i32, i32) {
    %c0_i32 = arith.constant 0 : i32
    %c0_i32_0 = arith.constant 0 : i32
    return %arg0, %c0_i32 : i32, i32
  }
  func.func @transform_1(%arg0: i32) -> (i32, i32) {
    %c0_i32 = arith.constant 0 : i32
    %c0_i32_0 = arith.constant 0 : i32
    %c0_i32_1 = arith.constant 0 : i32
    return %c0_i32, %c0_i32_0 : i32, i32
  }
  func.func @transform_2(%arg0: i32) -> (i32, i32) {
    %c0_i32 = arith.constant 0 : i32
    %c0_i32_0 = arith.constant 0 : i32
    %c0_i32_1 = arith.constant 0 : i32
    return %c0_i32, %c0_i32_0 : i32, i32
  }
  func.func @transform_3(%arg0: i32) -> (i32, i32) {
    %c0_i32 = arith.constant 0 : i32
    %c0_i32_0 = arith.constant 0 : i32
    %c0_i32_1 = arith.constant 0 : i32
    return %c0_i32, %c0_i32_0 : i32, i32
  }
  func.func @transform_4(%arg0: i32) -> (i32, i32) {
    %c0_i32 = arith.constant 0 : i32
    %c0_i32_0 = arith.constant 0 : i32
    %c0_i32_1 = arith.constant 0 : i32
    return %c0_i32, %c0_i32_0 : i32, i32
  }
  func.func @transform_5(%arg0: i32) -> (i32, i32) {
    %c0_i32 = arith.constant 0 : i32
    %c0_i32_0 = arith.constant 0 : i32
    return %arg0, %c0_i32 : i32, i32
  }
}

</mosaic_0001>

<llo_original>
// kernel: tpu_custom_call.1
$region0: #{tpu_custom_call.1}
  #allocation0 [shape = 'u32[]', space=smem, size = 0x4, offset = 0x4, fixed_abs, tag = 'smem constant byte address 0x4 - core index']
  #allocation1 [shape = 'u32[144,128]{1,0:T(1,128)}', space=vmem, size = 0x12000, scoped, tag = 'internal scratch']
  %s0 = inlined_call_operand.vmem [shape: f32[8,20], index: 0, kind: input, shape index: {}]
  %s1 = inlined_call_operand.vmem [shape: f32[20,10], index: 1, kind: input, shape index: {}]
  %s2 = inlined_call_operand.vmem [shape: f32[1,10], index: 2, kind: input, shape index: {}]
  %s3 = inlined_call_operand.vmem [shape: f32[10,2], index: 3, kind: input, shape index: {}]
  %s4 = inlined_call_operand.vmem [shape: f32[1,2], index: 4, kind: input, shape index: {}]
  %s5 = inlined_call_operand.vmem [shape: f32[8,2], index: 5, kind: output, shape index: {}]
  %s6 = sld [smem:[#allocation0]]
  $region30: #{tpu_custom_call.1} parent=0
    _
  %s8 = ssub.s32 1, %s6
  %s9 = scalar_select 0, %s8, %s6
  // Predicated region
  $region2: #{tpu_custom_call.1} parent=0 // pred_check
    _
  $region3: #{tpu_custom_call.1} parent=0 // pred_check_branch
    %11 = sbr.rel (0) target = $region5
  $region4: #{tpu_custom_call.1} parent=0 // pred_region
    _
  $region5: #{tpu_custom_call.1} parent=0 // pred_fallthru
    _
  // Predicated region
  $region6: #{tpu_custom_call.1} parent=0 // pred_check
    _
  $region7: #{tpu_custom_call.1} parent=0 // pred_check_branch
    %13 = sbr.rel (0) target = $region9
  $region8: #{tpu_custom_call.1} parent=0 // pred_region
    _
  $region9: #{tpu_custom_call.1} parent=0 // pred_fallthru
    _
  // Predicated region
  $region10: #{tpu_custom_call.1} parent=0 // pred_check
    _
  $region11: #{tpu_custom_call.1} parent=0 // pred_check_branch
    %15 = sbr.rel (0) target = $region13
  $region12: #{tpu_custom_call.1} parent=0 // pred_region
    _
  $region13: #{tpu_custom_call.1} parent=0 // pred_fallthru
    _
  // Predicated region
  $region14: #{tpu_custom_call.1} parent=0 // pred_check
    _
  $region15: #{tpu_custom_call.1} parent=0 // pred_check_branch
    %17 = sbr.rel (0) target = $region17
  $region16: #{tpu_custom_call.1} parent=0 // pred_region
    _
  $region17: #{tpu_custom_call.1} parent=0 // pred_fallthru
    _
  // Predicated region
  $region18: #{tpu_custom_call.1} parent=0 // pred_check
    _
  $region19: #{tpu_custom_call.1} parent=0 // pred_check_branch
    %19 = sbr.rel (0) target = $region21
  $region20: #{tpu_custom_call.1} parent=0 // pred_region
    _
  $region21: #{tpu_custom_call.1} parent=0 // pred_fallthru
    _
  %v20 = vld [vmem:[%s0] sm:$0xff]
  %v21 = vld [vmem:[%s1] sm:$0xff]
  %v22 = vld [vmem:[%s1 + $0x8] sm:$0xff]
  %v23 = vld [vmem:[%s1 + $0x10] sm:$0xf]
  %v24 = vld [vmem:[%s2] sm:$0x1]
  %v26 = vlaneseq
  %v27 = vshrl.u32 %v26, 7
  %v28 = vsub.s32 0, %v27
  %v29 = vrot.slane %v24, %v28
  %vm31 = vcmask 162816
  %v33 = vsel %vm31, %v20, 0
  %vm35 = vcmask 1043456
  %v37 = vsel %vm35, %v23, 0
  %39 = vmatprep.subr.mxu0 0.0
  %40 = vmatpush1.msra.mxu0 %v21
  %41 = vmatprep.subr.mxu0 0.0
  %42 = vmatpush1.msra.mxu0 %v22
  %43 = vmatprep.subr.mxu0 0.0
  %44 = vmatpush1.msra.mxu0 %v37
  %45 = vmatprep.subr.mxu0 0.0
  %46 = vmatpush1.msra.mxu0 0.0
  %47 = vmatprep.subr.mxu0 0.0
  %48 = vmatpush1.msra.mxu0 0.0
  %49 = vmatprep.subr.mxu0 0.0
  %50 = vmatpush1.msra.mxu0 0.0
  %51 = vmatprep.subr.mxu0 0.0
  %52 = vmatpush1.msra.mxu0 0.0
  %53 = vmatprep.subr.mxu0 0.0
  %54 = vmatpush1.msra.mxu0 0.0
  %55 = vmatprep.subr.mxu0 0.0
  %56 = vmatpush1.msra.mxu0 0.0
  %57 = vmatprep.subr.mxu0 0.0
  %58 = vmatpush1.msra.mxu0 0.0
  %59 = vmatprep.subr.mxu0 0.0
  %60 = vmatpush1.msra.mxu0 0.0
  %61 = vmatprep.subr.mxu0 0.0
  %62 = vmatpush1.msra.mxu0 0.0
  %63 = vmatprep.subr.mxu0 0.0
  %64 = vmatpush1.msra.mxu0 0.0
  %65 = vmatprep.subr.mxu0 0.0
  %66 = vmatpush1.msra.mxu0 0.0
  %67 = vmatprep.subr.mxu0 0.0
  %68 = vmatpush1.msra.mxu0 0.0
  %69 = vmatprep.subr.mxu0 0.0
  %70 = vmatpush1.msra.mxu0 0.0
  %71 = vmatprep.subr.mxu0 0.0
  %72 = vmatpush1.msra.mxu0 0.0
  %73 = vmatprep.subr.mxu0 0.0
  %74 = vmatpush1.msra.mxu0 0.0
  %75 = vmatprep.subr.mxu0 0.0
  %76 = vmatpush1.msra.mxu0 0.0
  %77 = vmatprep.subr.mxu0 0.0
  %78 = vmatpush1.msra.mxu0 0.0
  %79 = vmatprep.subr.mxu0 0.0
  %80 = vmatpush1.msra.mxu0 0.0
  %81 = vmatprep.subr.mxu0 0.0
  %82 = vmatpush1.msra.mxu0 0.0
  %83 = vmatprep.subr.mxu0 0.0
  %84 = vmatpush1.msra.mxu0 0.0
  %85 = vmatprep.subr.mxu0 0.0
  %86 = vmatpush1.msra.mxu0 0.0
  %87 = vmatprep.subr.mxu0 0.0
  %88 = vmatpush1.msra.mxu0 0.0
  %89 = vmatprep.subr.mxu0 0.0
  %90 = vmatpush1.msra.mxu0 0.0
  %91 = vmatprep.subr.mxu0 0.0
  %92 = vmatpush1.msra.mxu0 0.0
  %93 = vmatprep.subr.mxu0 0.0
  %94 = vmatpush1.msra.mxu0 0.0
  %95 = vmatprep.subr.mxu0 0.0
  %96 = vmatpush1.msra.mxu0 0.0
  %97 = vmatprep.subr.mxu0 0.0
  %98 = vmatpush1.msra.mxu0 0.0
  %99 = vmatprep.subr.mxu0 0.0
  %100 = vmatpush1.msra.mxu0 0.0
  %101 = vmatprep.subr.mxu0 0.0
  %102 = vmatpush1.msra.mxu0 0.0
  %103 = vmatprep.mubr.f32.mxu0 0.0
  %104 = vmatmul.mubr.f32.gmra.mrb[0].mxu0 %v33
  %v105 = vpop.f32.mrb[0].mxu0
  %v106 = vadd.f32 %v29, %v105
  %v107 = vpop.f32.mrb[0].mxu0
  %108 = vdwg.mxu0
  %v109 = vmax.f32 %v106, 0.0
  %v110 = vld [vmem:[%s3] sm:$0xff]
  %v111 = vld [vmem:[%s3 + $0x8] sm:$0x3]
  %v112 = vld [vmem:[%s4] sm:$0x1]
  %v114 = vlaneseq
  %v115 = vshrl.u32 %v114, 7
  %v116 = vsub.s32 0, %v115
  %v117 = vrot.slane %v112, %v116
  %vm119 = vcmask 80896
  %v121 = vsel %vm119, %v109, 0
  %vm123 = vcmask 1041408
  %v125 = vsel %vm123, %v111, 0
  %127 = vmatprep.subr.mxu0 0.0
  %128 = vmatpush1.msra.mxu0 %v110
  %129 = vmatprep.subr.mxu0 0.0
  %130 = vmatpush1.msra.mxu0 %v125
  %131 = vmatprep.subr.mxu0 0.0
  %132 = vmatpush1.msra.mxu0 0.0
  %133 = vmatprep.subr.mxu0 0.0
  %134 = vmatpush1.msra.mxu0 0.0
  %135 = vmatprep.subr.mxu0 0.0
  %136 = vmatpush1.msra.mxu0 0.0
  %137 = vmatprep.subr.mxu0 0.0
  %138 = vmatpush1.msra.mxu0 0.0
  %139 = vmatprep.subr.mxu0 0.0
  %140 = vmatpush1.msra.mxu0 0.0
  %141 = vmatprep.subr.mxu0 0.0
  %142 = vmatpush1.msra.mxu0 0.0
  %143 = vmatprep.subr.mxu0 0.0
  %144 = vmatpush1.msra.mxu0 0.0
  %145 = vmatprep.subr.mxu0 0.0
  %146 = vmatpush1.msra.mxu0 0.0
  %147 = vmatprep.subr.mxu0 0.0
  %148 = vmatpush1.msra.mxu0 0.0
  %149 = vmatprep.subr.mxu0 0.0
  %150 = vmatpush1.msra.mxu0 0.0
  %151 = vmatprep.subr.mxu0 0.0
  %152 = vmatpush1.msra.mxu0 0.0
  %153 = vmatprep.subr.mxu0 0.0
  %154 = vmatpush1.msra.mxu0 0.0
  %155 = vmatprep.subr.mxu0 0.0
  %156 = vmatpush1.msra.mxu0 0.0
  %157 = vmatprep.subr.mxu0 0.0
  %158 = vmatpush1.msra.mxu0 0.0
  %159 = vmatprep.subr.mxu0 0.0
  %160 = vmatpush1.msra.mxu0 0.0
  %161 = vmatprep.subr.mxu0 0.0
  %162 = vmatpush1.msra.mxu0 0.0
  %163 = vmatprep.subr.mxu0 0.0
  %164 = vmatpush1.msra.mxu0 0.0
  %165 = vmatprep.subr.mxu0 0.0
  %166 = vmatpush1.msra.mxu0 0.0
  %167 = vmatprep.subr.mxu0 0.0
  %168 = vmatpush1.msra.mxu0 0.0
  %169 = vmatprep.subr.mxu0 0.0
  %170 = vmatpush1.msra.mxu0 0.0
  %171 = vmatprep.subr.mxu0 0.0
  %172 = vmatpush1.msra.mxu0 0.0
  %173 = vmatprep.subr.mxu0 0.0
  %174 = vmatpush1.msra.mxu0 0.0
  %175 = vmatprep.subr.mxu0 0.0
  %176 = vmatpush1.msra.mxu0 0.0
  %177 = vmatprep.subr.mxu0 0.0
  %178 = vmatpush1.msra.mxu0 0.0
  %179 = vmatprep.subr.mxu0 0.0
  %180 = vmatpush1.msra.mxu0 0.0
  %181 = vmatprep.subr.mxu0 0.0
  %182 = vmatpush1.msra.mxu0 0.0
  %183 = vmatprep.subr.mxu0 0.0
  %184 = vmatpush1.msra.mxu0 0.0
  %185 = vmatprep.subr.mxu0 0.0
  %186 = vmatpush1.msra.mxu0 0.0
  %187 = vmatprep.subr.mxu0 0.0
  %188 = vmatpush1.msra.mxu0 0.0
  %189 = vmatprep.subr.mxu0 0.0
  %190 = vmatpush1.msra.mxu0 0.0
  %191 = vmatprep.mubr.f32.mxu0 0.0
  %192 = vmatmul.mubr.f32.gmra.mrb[0].mxu0 %v121
  %v193 = vpop.f32.mrb[0].mxu0
  %v194 = vadd.f32 %v117, %v193
  %v195 = vpop.f32.mrb[0].mxu0
  %196 = vdwg.mxu0
  %vm197 = vcmask 15360
  %198 = vst.msk [vmem:[%s5] sm:$0xff] %vm197, %v194
  // Predicated region
  $region22: #{tpu_custom_call.1} parent=0 // pred_check
    _
  $region23: #{tpu_custom_call.1} parent=0 // pred_check_branch
    %200 = sbr.rel (0) target = $region25
  $region24: #{tpu_custom_call.1} parent=0 // pred_region
    _
  $region25: #{tpu_custom_call.1} parent=0 // pred_fallthru
    _
  // Predicated region
  $region26: #{tpu_custom_call.1} parent=0 // pred_check
    _
  $region27: #{tpu_custom_call.1} parent=0 // pred_check_branch
    %202 = sbr.rel (0) target = $region29
  $region28: #{tpu_custom_call.1} parent=0 // pred_region
    _
  $region29: #{tpu_custom_call.1} parent=0 // pred_fallthru
    _

</llo_original>
